<compile_context>
chip_gen: v6e
topology: v6e:2x2x1
jax: 0.10.0
libtpu: 0.0.40
codegen_flags: <defaults>
</compile_context>

<pallas_src>
import jax
import jax.numpy as jnp
from jax.experimental import pallas as pl
from jax.experimental.pallas import tpu as pltpu


# ----------------------------------------------------------------------------
# Pallas kernel
# ----------------------------------------------------------------------------
def _soft_pos_embed_kernel(x_ref, g_ref, w_ref, b_ref, o_ref):
    """out[c, hw] = x[c, hw] + (W @ grid^T)[c, hw] + bias[c].

    x_ref : (1, C, HW_BLK) f32  -- one batch element, one spatial tile (NCHW, HW flattened)
    g_ref : (4, HW_BLK)    f32  -- transposed position grid tile
    w_ref : (C, 4)         f32  -- nn.Linear weight (PyTorch layout)
    b_ref : (C, 1)         f32  -- nn.Linear bias
    o_ref : (1, C, HW_BLK) f32
    """
    proj = jnp.dot(w_ref[...], g_ref[...],
                   preferred_element_type=jnp.float32) + b_ref[...]
    o_ref[...] = x_ref[...] + proj[None, :, :]


# ----------------------------------------------------------------------------
# Wrapper
# ----------------------------------------------------------------------------
def _pick_hw_block(hw):
    """Largest lane-dense (multiple-of-128) divisor of HW, capped at 2048."""
    if hw % 128 != 0:
        return hw                      # full-extent block is always legal
    for cand in (2048, 1024, 512, 256, 128):
        if hw % cand == 0:
            return cand
    return hw


def soft_position_embed(inputs_nchw, grid_1hw4, weight, bias):
    """inputs (B,C,H,W), grid (1,H,W,4), weight (C,4), bias (C,) -> (B,C,H,W)."""
    B, C, H, W = inputs_nchw.shape
    HW = H * W

    x = inputs_nchw.reshape(B, C, HW).astype(jnp.float32)            # contiguous reshape
    g_t = jnp.transpose(grid_1hw4.reshape(HW, 4)).astype(jnp.float32)  # (4, HW)
    w = weight.astype(jnp.float32)                                    # (C, 4)
    b = bias.reshape(C, 1).astype(jnp.float32)                        # (C, 1)

    hw_blk = _pick_hw_block(HW)
    n_hw = HW // hw_blk

    out = pl.pallas_call(
        _soft_pos_embed_kernel,
        grid=(B, n_hw),
        in_specs=[
            pl.BlockSpec((1, C, hw_blk), lambda bi, j: (bi, 0, j)),   # inputs tile
            pl.BlockSpec((4, hw_blk), lambda bi, j: (0, j)),          # grid^T tile
            pl.BlockSpec((C, 4), lambda bi, j: (0, 0)),               # weight (resident)
            pl.BlockSpec((C, 1), lambda bi, j: (0, 0)),               # bias  (resident)
        ],
        out_specs=pl.BlockSpec((1, C, hw_blk), lambda bi, j: (bi, 0, j)),
        out_shape=jax.ShapeDtypeStruct((B, C, HW), jnp.float32),
        compiler_params=pltpu.CompilerParams(
            dimension_semantics=("parallel", "parallel")),
    )(x, g_t, w, b)
    return out.reshape(B, C, H, W)


# ----------------------------------------------------------------------------
# Plain-JAX helpers (buffer construction + reference)
# ----------------------------------------------------------------------------
def build_grid(resolution):
    """utils.build_grid: (1, H, W, 4) with [y, x, 1-y, 1-x] in [0, 1]."""
    H, W = resolution
    ry = jnp.linspace(0.0, 1.0, H)
    rx = jnp.linspace(0.0, 1.0, W)
    gy, gx = jnp.meshgrid(ry, rx, indexing="ij")
    grid = jnp.stack([gy, gx], axis=-1).reshape(1, H, W, 2)
    grid = jnp.concatenate([grid, 1.0 - grid], axis=-1)
    return grid.astype(jnp.float32)


def reference(inputs, grid, weight, bias):
    emb = jnp.einsum("bhwk,ck->bhwc", grid, weight) + bias            # dense(grid)
    emb = jnp.transpose(emb, (0, 3, 1, 2))                            # permute(0,3,1,2)
    return inputs + emb


# ----------------------------------------------------------------------------
# Demo / self-test
# ----------------------------------------------------------------------------
if __name__ == "__main__":
    key = jax.random.PRNGKey(0)
    k_x, k_w, k_b = jax.random.split(key, 3)

    B, hidden, H, W = 2, 32, 16, 16                    # inputs: (B, hidden, H, W)
    inputs = jax.random.normal(k_x, (B, hidden, H, W), jnp.float32)
    grid = build_grid((H, W))

    # nn.Linear(4, hidden) default init: U(-1/sqrt(4), 1/sqrt(4))
    bound = 0.5
    weight = jax.random.uniform(k_w, (hidden, 4), jnp.float32, -bound, bound)
    bias = jax.random.uniform(k_b, (hidden,), jnp.float32, -bound, bound)

    out = soft_position_embed(inputs, grid, weight, bias)
    out = jax.block_until_ready(out)

    ref = reference(inputs, grid, weight, bias)
    assert out.shape == (B, hidden, H, W)
    assert jnp.allclose(out, ref, atol=1e-5, rtol=1e-5), \
        float(jnp.max(jnp.abs(out - ref)))
    print("KERNEL_OK")
</pallas_src>

<mosaic_0001>
module attributes {stable_mosaic.version = 11 : i64} {
  func.func @_soft_pos_embed_kernel(%arg0: i32, %arg1: i32, %arg2: memref<1x32x256xf32, #tpu.memory_space<vmem>>, %arg3: memref<4x256xf32, #tpu.memory_space<vmem>>, %arg4: memref<32x4xf32, #tpu.memory_space<vmem>>, %arg5: memref<32x1xf32, #tpu.memory_space<vmem>>, %arg6: memref<1x32x256xf32, #tpu.memory_space<vmem>>) attributes {dimension_semantics = [#tpu.dimension_semantics<parallel>, #tpu.dimension_semantics<parallel>], iteration_bounds = array<i64: 2, 1>, scalar_prefetch = 0 : i64, scratch_operands = 0 : i64, tpu.core_type = #tpu.core_type<tc>, window_params = [{transform_indices = @transform_0, window_bounds = array<i64: 1, 32, 256>}, {transform_indices = @transform_1, window_bounds = array<i64: 4, 256>}, {pipeline_mode = #tpu.pipeline_mode<synchronous>, transform_indices = @transform_2, window_bounds = array<i64: 32, 4>}, {pipeline_mode = #tpu.pipeline_mode<synchronous>, transform_indices = @transform_3, window_bounds = array<i64: 32, 1>}, {transform_indices = @transform_4, window_bounds = array<i64: 1, 32, 256>}]} {
    %c0 = arith.constant 0 : index
    %c0_0 = arith.constant 0 : index
    %0 = vector.load %arg4[%c0, %c0_0] : memref<32x4xf32, #tpu.memory_space<vmem>>, vector<32x4xf32>
    %c0_1 = arith.constant 0 : index
    %c0_2 = arith.constant 0 : index
    %1 = vector.load %arg3[%c0_1, %c0_2] : memref<4x256xf32, #tpu.memory_space<vmem>>, vector<4x256xf32>
    %cst = arith.constant dense<0.000000e+00> : vector<32x256xf32>
    %2 = tpu.matmul %0, %1, %cst {dimension_numbers = #tpu.dot_dimension_numbers<[1], [0], [0], [1], [0, 0, 1, 1], [], []>} : vector<32x4xf32>, vector<4x256xf32>, vector<32x256xf32> -> vector<32x256xf32>
    %c0_3 = arith.constant 0 : index
    %c0_4 = arith.constant 0 : index
    %3 = vector.load %arg5[%c0_3, %c0_4] : memref<32x1xf32, #tpu.memory_space<vmem>>, vector<32x1xf32>
    %4 = vector.broadcast %3 : vector<32x1xf32> to vector<32x256xf32>
    %5 = arith.addf %2, %4 : vector<32x256xf32>
    %c0_5 = arith.constant 0 : index
    %c0_6 = arith.constant 0 : index
    %c0_7 = arith.constant 0 : index
    %6 = vector.load %arg2[%c0_5, %c0_6, %c0_7] : memref<1x32x256xf32, #tpu.memory_space<vmem>>, vector<1x32x256xf32>
    %7 = vector.shape_cast %5 : vector<32x256xf32> to vector<1x32x256xf32>
    %8 = arith.addf %6, %7 : vector<1x32x256xf32>
    %c0_8 = arith.constant 0 : index
    %c0_9 = arith.constant 0 : index
    %c0_10 = arith.constant 0 : index
    %9 = vector.load %arg6[%c0_8, %c0_9, %c0_10] : memref<1x32x256xf32, #tpu.memory_space<vmem>>, vector<1x32x256xf32>
    tpu.vector_store %arg6[%c0_8, %c0_9, %c0_10], %8 {strides = array<i32>} : memref<1x32x256xf32, #tpu.memory_space<vmem>>, vector<1x32x256xf32>,
    return
  }
  func.func @transform_0(%arg0: i32, %arg1: i32) -> (i32, i32, i32) {
    %c0_i32 = arith.constant 0 : i32
    %c0_i32_0 = arith.constant 0 : i32
    return %arg0, %c0_i32, %arg1 : i32, i32, i32
  }
  func.func @transform_1(%arg0: i32, %arg1: i32) -> (i32, i32) {
    %c0_i32 = arith.constant 0 : i32
    %c0_i32_0 = arith.constant 0 : i32
    return %c0_i32, %arg1 : i32, i32
  }
  func.func @transform_2(%arg0: i32, %arg1: i32) -> (i32, i32) {
    %c0_i32 = arith.constant 0 : i32
    %c0_i32_0 = arith.constant 0 : i32
    %c0_i32_1 = arith.constant 0 : i32
    return %c0_i32, %c0_i32_0 : i32, i32
  }
  func.func @transform_3(%arg0: i32, %arg1: i32) -> (i32, i32) {
    %c0_i32 = arith.constant 0 : i32
    %c0_i32_0 = arith.constant 0 : i32
    %c0_i32_1 = arith.constant 0 : i32
    return %c0_i32, %c0_i32_0 : i32, i32
  }
  func.func @transform_4(%arg0: i32, %arg1: i32) -> (i32, i32, i32) {
    %c0_i32 = arith.constant 0 : i32
    %c0_i32_0 = arith.constant 0 : i32
    return %arg0, %c0_i32, %arg1 : i32, i32, i32
  }
}

</mosaic_0001>

<llo_original>
// kernel: tpu_custom_call.1
$region0: #{tpu_custom_call.1}
  #allocation0 [shape = 'u32[]', space=smem, size = 0x4, offset = 0x4, fixed_abs, tag = 'smem constant byte address 0x4 - core index']
  #allocation1 [shape = 'u32[144,128]{1,0:T(1,128)}', space=vmem, size = 0x12000, scoped, tag = 'internal scratch']
  %s0 = inlined_call_operand.hbm [shape: f32[2,32,256], index: 0, kind: input, shape index: {}]
  %s1 = inlined_call_operand.vmem [shape: f32[4,256], index: 1, kind: input, shape index: {}]
  %s2 = inlined_call_operand.vmem [shape: f32[32,4], index: 2, kind: input, shape index: {}]
  %s3 = inlined_call_operand.vmem [shape: f32[32,1], index: 3, kind: input, shape index: {}]
  %s4 = inlined_call_operand.hbm [shape: f32[2,32,256], index: 4, kind: output, shape index: {}]
  %s5 = sld [smem:[#allocation0]]
  $region53: #{tpu_custom_call.1} parent=0
    _
  %s7 = ssub.s32 1, %s5
  %s8 = scalar_select 0, %s7, %s5
  $region1: #{tpu_custom_call.1} parent=0
    #allocation2 [shape = 'u8[65536]{0}', space=vmem, size = 0x10000, scoped, tag = 'input window, operand 0']
    #allocation3 [shape = 's32[2]{0}', space=sflag, size = 0x8, scoped, tag = 'scoped memory for tpu_custom_call.1']
    #allocation4 [shape = 's32[2]{0}', space=sflag, size = 0x8, scoped, tag = 'scoped memory for tpu_custom_call.1']
    #allocation5 [shape = 'u8[65536]{0}', space=vmem, size = 0x10000, scoped, tag = 'output window, operand 0']
    %9 = vsyncpa [#allocation3], 0
    %s10 = scalar_lea.sflag [#allocation3], 1
    %11 = vsyncpa %s10, 0
    %12 = vsyncpa [#allocation4], 0
    %s13 = scalar_lea.sflag [#allocation4], 1
    %14 = vsyncpa %s13, 0
    loop: start=0, step=1, limit=4
    $region2: #{tpu_custom_call.1} parent=1 // loop_pre_header
      _
    $region3: #{tpu_custom_call.1} parent=1 // loop_header
      %s16 = sphi 0, %s20
      %p17 = scmp.ge.s32.totalorder %s16, 4
      %s23 = sphi 0, %s35
      %s24 = sphi 0, %s31
      %s25 = sphi 0, %s23
      %s26 = sphi 0, %s24
      %s27 = sphi 0, %s25
      %s28 = sphi 0, %s26
      %s40 = sphi 0, %s42
      %s43 = sphi 0, %s40
      %s44 = sphi 0, %s43
      %s60 = sphi 0, %s44
      %s66 = sphi 0, %s68
      %s69 = sphi 0, %s66
      %s70 = sphi 0, %s69
      %s86 = sphi 0, %s70
      %s90 = sphi 0, %s90
      %s92 = sphi 0, %s90
      %s93 = sphi 0, %s92
      %s107 = sphi 0, %s93
      %s111 = sphi 0, %s111
      %s113 = sphi 0, %s111
      %s114 = sphi 0, %s113
      %s128 = sphi 0, %s114
      %s136 = sphi 0, %s138
      %s139 = sphi 0, %s136
      %s140 = sphi 0, %s139
      %s156 = sphi 0, %s140
    $region4: #{tpu_custom_call.1} parent=1 // loop_header_branch
      %19 = sbr.rel (%p17) target = $region8
    $region5: #{tpu_custom_call.1} parent=1 // loop_body
      %s21 = ssub.s32 %s16, 1
      %s22 = ssub.s32 %s16, 2
      %s29 = sadd.s32 1, %s24
      %p30 = scmp.ge.s32.totalorder %s29, 1
      %s31 = scalar_select %p30, 0, %s29
      %s32 = sadd.s32 1, %s23
      %s33 = scalar_select %p30, %s32, %s23
      %p34 = scmp.ge.s32.totalorder %s33, 2
      %s35 = scalar_select %p34, 0, %s33
      %s36 = ssub.s32 %s23, %s35
      %s37 = ssub.s32 %s24, %s31
      %s38 = sor.u32 %s36, %s37
      %p39 = scmp.eq.s32.totalorder %s38, 0
      %s41 = sadd.s32 %s40, 1
      %s42 = scalar_select %p39, %s40, %s41
      %p45 = pneg %p39
      %p46 = scmp.eq.s32.totalorder %s16, 1
      %p47 = por %p45, %p46
      %p48 = scmp.ne.s32.totalorder %s40, %s43
      %p49 = scmp.eq.s32.totalorder %s16, 0
      %p50 = por %p48, %p49
      %p51 = scmp.ne.s32.totalorder %s40, %s43
      %p52 = scmp.eq.s32.totalorder %s21, 1
      %p53 = por %p51, %p52
      %p54 = scmp.ne.s32.totalorder %s43, %s44
      %p55 = scmp.eq.s32.totalorder %s21, 0
      %p56 = por %p54, %p55
      %p57 = scmp.ne.s32.totalorder %s43, %s44
      %p58 = scmp.eq.s32.totalorder %s22, 1
      %p59 = por %p57, %p58
      %p61 = scmp.ne.s32.totalorder %s44, %s60
      %p62 = scmp.eq.s32.totalorder %s22, 0
      %p63 = por %p61, %p62
      %s64 = ssub.s32 %s24, %s31
      %p65 = scmp.eq.s32.totalorder %s64, 0
      %s67 = sadd.s32 %s66, 1
      %s68 = scalar_select %p65, %s66, %s67
      %p71 = pneg %p65
      %p72 = scmp.eq.s32.totalorder %s16, 1
      %p73 = por %p71, %p72
      %p74 = scmp.ne.s32.totalorder %s66, %s69
      %p75 = scmp.eq.s32.totalorder %s16, 0
      %p76 = por %p74, %p75
      %p77 = scmp.ne.s32.totalorder %s66, %s69
      %p78 = scmp.eq.s32.totalorder %s21, 1
      %p79 = por %p77, %p78
      %p80 = scmp.ne.s32.totalorder %s69, %s70
      %p81 = scmp.eq.s32.totalorder %s21, 0
      %p82 = por %p80, %p81
      %p83 = scmp.ne.s32.totalorder %s69, %s70
      %p84 = scmp.eq.s32.totalorder %s22, 1
      %p85 = por %p83, %p84
      %p87 = scmp.ne.s32.totalorder %s70, %s86
      %p88 = scmp.eq.s32.totalorder %s22, 0
      %p89 = por %p87, %p88
      %s91 = sadd.s32 %s90, 1
      %p94 = scmp.eq.s32.totalorder %s16, 1
      %p95 = scmp.ne.s32.totalorder %s90, %s92
      %p96 = scmp.eq.s32.totalorder %s16, 0
      %p97 = por %p95, %p96
      %p98 = scmp.ne.s32.totalorder %s90, %s92
      %p99 = scmp.eq.s32.totalorder %s21, 1
      %p100 = por %p98, %p99
      %p101 = scmp.ne.s32.totalorder %s92, %s93
      %p102 = scmp.eq.s32.totalorder %s21, 0
      %p103 = por %p101, %p102
      %p104 = scmp.ne.s32.totalorder %s92, %s93
      %p105 = scmp.eq.s32.totalorder %s22, 1
      %p106 = por %p104, %p105
      %p108 = scmp.ne.s32.totalorder %s93, %s107
      %p109 = scmp.eq.s32.totalorder %s22, 0
      %p110 = por %p108, %p109
      %s112 = sadd.s32 %s111, 1
      %p115 = scmp.eq.s32.totalorder %s16, 1
      %p116 = scmp.ne.s32.totalorder %s111, %s113
      %p117 = scmp.eq.s32.totalorder %s16, 0
      %p118 = por %p116, %p117
      %p119 = scmp.ne.s32.totalorder %s111, %s113
      %p120 = scmp.eq.s32.totalorder %s21, 1
      %p121 = por %p119, %p120
      %p122 = scmp.ne.s32.totalorder %s113, %s114
      %p123 = scmp.eq.s32.totalorder %s21, 0
      %p124 = por %p122, %p123
      %p125 = scmp.ne.s32.totalorder %s113, %s114
      %p126 = scmp.eq.s32.totalorder %s22, 1
      %p127 = por %p125, %p126
      %p129 = scmp.ne.s32.totalorder %s114, %s128
      %p130 = scmp.eq.s32.totalorder %s22, 0
      %p131 = por %p129, %p130
      %s132 = ssub.s32 %s23, %s35
      %s133 = ssub.s32 %s24, %s31
      %s134 = sor.u32 %s132, %s133
      %p135 = scmp.eq.s32.totalorder %s134, 0
      %s137 = sadd.s32 %s136, 1
      %s138 = scalar_select %p135, %s136, %s137
      %p141 = pneg %p135
      %p142 = scmp.eq.s32.totalorder %s16, 1
      %p143 = por %p141, %p142
      %p144 = scmp.ne.s32.totalorder %s136, %s139
      %p145 = scmp.eq.s32.totalorder %s16, 0
      %p146 = por %p144, %p145
      %p147 = scmp.ne.s32.totalorder %s136, %s139
      %p148 = scmp.eq.s32.totalorder %s21, 1
      %p149 = por %p147, %p148
      %p150 = scmp.ne.s32.totalorder %s139, %s140
      %p151 = scmp.eq.s32.totalorder %s21, 0
      %p152 = por %p150, %p151
      %p153 = scmp.ne.s32.totalorder %s139, %s140
      %p154 = scmp.eq.s32.totalorder %s22, 1
      %p155 = por %p153, %p154
      %p157 = scmp.ne.s32.totalorder %s140, %s156
      %p158 = scmp.eq.s32.totalorder %s22, 0
      %p159 = por %p157, %p158
      %p160 = scmp.le.s32.totalorder 1, %s16
      %p161 = scmp.lt.s32.totalorder %s16, 3
      %p162 = pnand %p160, %p161
      %p163 = pneg %p162
      // Predicated region
      $region9: #{tpu_custom_call.1} parent=5 // pred_check
        _
      $region10: #{tpu_custom_call.1} parent=5 // pred_check_branch
        %165 = sbr.rel (%p162) target = $region12
      $region11: #{tpu_custom_call.1} parent=5 // pred_region
        %s166 = ssub.s32 %s16, 1
        // Predicated region
        $region13: #{tpu_custom_call.1} parent=11 // pred_check
          %p167 = pneg %p82
        $region14: #{tpu_custom_call.1} parent=11 // pred_check_branch
          %169 = sbr.rel (%p167) target = $region16
        $region15: #{tpu_custom_call.1} parent=11 // pred_region
          %s170 = smul.u32 2, %s26
          %p171 = scmp.lt.s32.totalorder %s170, 1
          %s172 = scalar_select %p171, %s170, 1
          %s173 = smul.addr %s172, 4
          %s174 = scalar_lea.vmem %s1, %s173
          %s175 = smul.u32 2, %s26
        $region16: #{tpu_custom_call.1} parent=11 // pred_fallthru
          _
        // Predicated region
        $region17: #{tpu_custom_call.1} parent=11 // pred_check
          %p176 = pneg %p103
        $region18: #{tpu_custom_call.1} parent=11 // pred_check_branch
          %178 = sbr.rel (%p176) target = $region20
        $region19: #{tpu_custom_call.1} parent=11 // pred_region
          _
        $region20: #{tpu_custom_call.1} parent=11 // pred_fallthru
          _
        // Predicated region
        $region21: #{tpu_custom_call.1} parent=11 // pred_check
          %p179 = pneg %p124
        $region22: #{tpu_custom_call.1} parent=11 // pred_check_branch
          %181 = sbr.rel (%p179) target = $region24
        $region23: #{tpu_custom_call.1} parent=11 // pred_region
          _
        $region24: #{tpu_custom_call.1} parent=11 // pred_fallthru
          _
      $region12: #{tpu_custom_call.1} parent=5 // pred_fallthru
        _
      %p182 = scmp.lt.s32.totalorder %s16, 2
      // Predicated region
      $region25: #{tpu_custom_call.1} parent=5 // pred_check
        %p183 = pneg %p182
      $region26: #{tpu_custom_call.1} parent=5 // pred_check_branch
        %185 = sbr.rel (%p183) target = $region28
      $region27: #{tpu_custom_call.1} parent=5 // pred_region
        // Predicated region
        $region29: #{tpu_custom_call.1} parent=27 // pred_check
          %p186 = pneg %p50
        $region30: #{tpu_custom_call.1} parent=27 // pred_check_branch
          %188 = sbr.rel (%p186) target = $region32
        $region31: #{tpu_custom_call.1} parent=27 // pred_region
          %s189 = sand.u32 %s40, 1
          %s190 = scalar_lea.sflag [#allocation3], %s189
          %s191 = sand.u32 %s40, 1
          %s192 = smul.addr %s191, 64
          %s193 = scalar_lea.vmem [#allocation2], %s192
          %s194 = smul.u32 2, %s24
          %s196 = ssub.s32 1024, 1024
          %197 = vsyncadd %s190, %s196
          %s198 = smul.addr %s23, 8
          %s199 = sadd.s32 %s194, %s198
          %s200 = smul.addr %s199, 128
          %s201 = scalar_lea.hbm %s0, %s200
          %s202 = sshll.u32 %s193, 4
          %s203 = int_to_ptr.vmem [resolvable:$true] %s202
          %208 = dma.hbm_to_vmem [thread:$0]  %s201, 1024, %s203, %s190, 256, 256, 16
        $region32: #{tpu_custom_call.1} parent=27 // pred_fallthru
          _
      $region28: #{tpu_custom_call.1} parent=5 // pred_fallthru
        _
      %p209 = scmp.le.s32.totalorder 1, %s16
      %p210 = scmp.lt.s32.totalorder %s16, 3
      %p211 = pnand %p209, %p210
      %p212 = pneg %p211
      // Predicated region
      $region33: #{tpu_custom_call.1} parent=5 // pred_check
        _
      $region34: #{tpu_custom_call.1} parent=5 // pred_check_branch
        %214 = sbr.rel (%p211) target = $region36
      $region35: #{tpu_custom_call.1} parent=5 // pred_region
        %s215 = ssub.s32 %s16, 1
        %s216 = sand.u32 %s43, 1
        %s217 = scalar_lea.sflag [#allocation3], %s216
        %s218 = sand.u32 %s43, 1
        %s219 = smul.addr %s218, 64
        %s220 = scalar_lea.vmem [#allocation2], %s219
        // Predicated region
        $region37: #{tpu_custom_call.1} parent=35 // pred_check
          %p221 = pneg %p56
        $region38: #{tpu_custom_call.1} parent=35 // pred_check_branch
          %223 = sbr.rel (%p221) target = $region40
        $region39: #{tpu_custom_call.1} parent=35 // pred_region
          %224 = dma.done %s217, 1024
        $region40: #{tpu_custom_call.1} parent=35 // pred_fallthru
          _
        %s225 = sand.u32 %s43, 1
        %s226 = scalar_lea.sflag [#allocation3], %s225
        %s227 = sand.u32 %s43, 1
        %s228 = smul.addr %s227, 64
        %s229 = scalar_lea.vmem [#allocation2], %s228
        %p230 = pneg %p56
        %p231 = pneg %p53
        %s232 = smul.u32 2, %s26
        %p233 = scmp.lt.s32.totalorder %s232, 1
        %s234 = scalar_select %p233, %s232, 1
        %s235 = smul.addr %s234, 4
        %s236 = scalar_lea.vmem %s1, %s235
        %p237 = pneg %p82
        %p238 = pneg %p79
        %p239 = pneg %p103
        %p240 = pneg %p100
        %p241 = pneg %p124
        %p242 = pneg %p121
        %p243 = pneg %p152
        %p244 = pneg %p149
        %s245 = sand.u32 %s139, 1
        %s246 = scalar_lea.sflag [#allocation4], %s245
        %s247 = sand.u32 %s139, 1
        %s248 = smul.addr %s247, 64
        %s249 = scalar_lea.vmem [#allocation5], %s248
        %s250 = smul.u32 2, %s26
        %s251 = smul.u32 2, %s26
        %p252 = scmp.lt.s32.totalorder %s251, 1
        %s253 = scalar_select %p252, %s251, 1
        %s254 = smul.addr %s253, 4
        %s255 = scalar_lea.vmem %s1, %s254
        %s256 = smul.u32 2, %s26
        %s257 = smul.u32 2, %s26
        %v258 = vld [vmem:[%s2] sm:$0xff]
        %v259 = vld [vmem:[%s2 + $0x8] sm:$0xff]
        %v260 = vld [vmem:[%s2 + $0x10] sm:$0xff]
        %v261 = vld [vmem:[%s2 + $0x18] sm:$0xff]
        %v262 = vld [vmem:[%s255] sm:$0xff]
        %v263 = vld [vmem:[%s3] sm:$0xff]
        %v264 = vld [vmem:[%s3 + $0x8] sm:$0xff]
        %v265 = vld [vmem:[%s3 + $0x10] sm:$0xff]
        %v266 = vld [vmem:[%s3 + $0x18] sm:$0xff]
        %268 = vset.pattern.permute.xlu0 0
        %269 = vperm.xlu0 %268, %v263
        %v270 = vpop.permute.xlu0 %269
        %273 = vset.pattern.permute.xlu0 0
        %274 = vperm.xlu0 %273, %v264
        %v275 = vpop.permute.xlu0 %274
        %278 = vset.pattern.permute.xlu0 0
        %279 = vperm.xlu0 %278, %v265
        %v280 = vpop.permute.xlu0 %279
        %283 = vset.pattern.permute.xlu0 0
        %284 = vperm.xlu0 %283, %v266
        %v285 = vpop.permute.xlu0 %284
        %v288 = vcombine.high %v262, %v262
        %vm289 = vcmask 31744
        %v291 = vsel %vm289, %v258, 0
        %v294 = vsel %vm289, %v259, 0
        %v297 = vsel %vm289, %v260, 0
        %v300 = vsel %vm289, %v261, 0
        %vm302 = vcmask 1043456
        %v303 = vsel %vm302, %v262, 0
        %v305 = vsel %vm302, %v288, 0
        %307 = vmatprep.subr.mxu0 0.0
        %308 = vmatpush1.msra.mxu0 0.0
        %309 = vmatprep.subr.mxu0 0.0
        %310 = vmatpush1.msra.mxu0 0.0
        %311 = vmatprep.subr.mxu0 0.0
        %312 = vmatpush1.msra.mxu0 0.0
        %313 = vmatprep.subr.mxu0 0.0
        %314 = vmatpush1.msra.mxu0 0.0
        %315 = vmatprep.subr.mxu0 0.0
        %316 = vmatpush1.msra.mxu0 0.0
        %317 = vmatprep.subr.mxu0 0.0
        %318 = vmatpush1.msra.mxu0 0.0
        %319 = vmatprep.subr.mxu0 0.0
        %320 = vmatpush1.msra.mxu0 0.0
        %321 = vmatprep.subr.mxu0 0.0
        %322 = vmatpush1.msra.mxu0 0.0
        %323 = vmatprep.subr.mxu0 0.0
        %324 = vmatpush1.msra.mxu0 0.0
        %325 = vmatprep.subr.mxu0 0.0
        %326 = vmatpush1.msra.mxu0 0.0
        %327 = vmatprep.subr.mxu0 0.0
        %328 = vmatpush1.msra.mxu0 0.0
        %329 = vmatprep.subr.mxu0 0.0
        %330 = vmatpush1.msra.mxu0 0.0
        %331 = vmatprep.subr.mxu0 0.0
        %332 = vmatpush1.msra.mxu0 0.0
        %333 = vmatprep.subr.mxu0 0.0
        %334 = vmatpush1.msra.mxu0 0.0
        %335 = vmatprep.subr.mxu0 0.0
        %336 = vmatpush1.msra.mxu0 0.0
        %337 = vmatprep.subr.mxu0 %v305
        %338 = vmatpush1.msra.mxu0 %v303
        %339 = vmatprep.subr.mxu0 0.0
        %340 = vmatpush2.msra.mxu0 0.0
        %341 = vmatprep.subr.mxu0 0.0
        %342 = vmatpush2.msra.mxu0 0.0
        %343 = vmatprep.subr.mxu0 0.0
        %344 = vmatpush2.msra.mxu0 0.0
        %345 = vmatprep.subr.mxu0 0.0
        %346 = vmatpush2.msra.mxu0 0.0
        %347 = vmatprep.subr.mxu0 0.0
        %348 = vmatpush2.msra.mxu0 0.0
        %349 = vmatprep.subr.mxu0 0.0
        %350 = vmatpush2.msra.mxu0 0.0
        %351 = vmatprep.subr.mxu0 0.0
        %352 = vmatpush2.msra.mxu0 0.0
        %353 = vmatprep.subr.mxu0 0.0
        %354 = vmatpush2.msra.mxu0 0.0
        %355 = vmatprep.subr.mxu0 0.0
        %356 = vmatpush2.msra.mxu0 0.0
        %357 = vmatprep.subr.mxu0 0.0
        %358 = vmatpush2.msra.mxu0 0.0
        %359 = vmatprep.subr.mxu0 0.0
        %360 = vmatpush2.msra.mxu0 0.0
        %361 = vmatprep.subr.mxu0 0.0
        %362 = vmatpush2.msra.mxu0 0.0
        %363 = vmatprep.subr.mxu0 0.0
        %364 = vmatpush2.msra.mxu0 0.0
        %365 = vmatprep.subr.mxu0 0.0
        %366 = vmatpush2.msra.mxu0 0.0
        %367 = vmatprep.subr.mxu0 0.0
        %368 = vmatpush2.msra.mxu0 0.0
        %369 = vmatprep.subr.mxu0 0.0
        %370 = vmatpush2.msra.mxu0 0.0
        %371 = vmatprep.mubr.f32.mxu0 0.0
        %372 = vmatmul.mubr.f32.gmra.mxu0 %v291
        %v373 = vpop.f32.mrf.mxu0
        %v374 = vadd.f32 %v270, %v373
        %v375 = vpop.f32.mrf.mxu0
        %v376 = vadd.f32 %v270, %v375
        %377 = vmatprep.mubr.f32.mxu0 0.0
        %378 = vmatmul.mubr.f32.gmra.mxu0 %v294
        %v379 = vpop.f32.mrf.mxu0
        %v380 = vadd.f32 %v275, %v379
        %v381 = vpop.f32.mrf.mxu0
        %v382 = vadd.f32 %v275, %v381
        %383 = vmatprep.mubr.f32.mxu0 0.0
        %384 = vmatmul.mubr.f32.gmra.mxu0 %v297
        %v385 = vpop.f32.mrf.mxu0
        %v386 = vadd.f32 %v280, %v385
        %v387 = vpop.f32.mrf.mxu0
        %v388 = vadd.f32 %v280, %v387
        %389 = vmatprep.mubr.f32.mxu0 0.0
        %390 = vmatmul.mubr.f32.gmra.mxu0 %v300
        %v391 = vpop.f32.mrf.mxu0
        %v392 = vadd.f32 %v285, %v391
        %v393 = vpop.f32.mrf.mxu0
        %v394 = vadd.f32 %v285, %v393
        %395 = vdwg.mxu0
        %v396 = vld [vmem:[%s220] sm:$0xff]
        %v397 = vld [vmem:[%s220 + $0x8] sm:$0xff]
        %v398 = vld [vmem:[%s220 + $0x10] sm:$0xff]
        %v399 = vld [vmem:[%s220 + $0x18] sm:$0xff]
        %v400 = vld [vmem:[%s220 + $0x20] sm:$0xff]
        %v401 = vld [vmem:[%s220 + $0x28] sm:$0xff]
        %v402 = vld [vmem:[%s220 + $0x30] sm:$0xff]
        %v403 = vld [vmem:[%s220 + $0x38] sm:$0xff]
        %v404 = vadd.f32 %v396, %v374
        %v405 = vadd.f32 %v397, %v376
        %v406 = vadd.f32 %v398, %v380
        %v407 = vadd.f32 %v399, %v382
        %v408 = vadd.f32 %v400, %v386
        %v409 = vadd.f32 %v401, %v388
        %v410 = vadd.f32 %v402, %v392
        %v411 = vadd.f32 %v403, %v394
        %412 = vst [vmem:[%s249] sm:$0xff] %v404
        %413 = vst [vmem:[%s249 + $0x8] sm:$0xff] %v405
        %414 = vst [vmem:[%s249 + $0x10] sm:$0xff] %v406
        %415 = vst [vmem:[%s249 + $0x18] sm:$0xff] %v407
        %416 = vst [vmem:[%s249 + $0x20] sm:$0xff] %v408
        %417 = vst [vmem:[%s249 + $0x28] sm:$0xff] %v409
        %418 = vst [vmem:[%s249 + $0x30] sm:$0xff] %v410
        %419 = vst [vmem:[%s249 + $0x38] sm:$0xff] %v411
        %s420 = sand.u32 %s139, 1
        %s421 = scalar_lea.sflag [#allocation4], %s420
        %s422 = sand.u32 %s139, 1
        %s423 = smul.addr %s422, 64
        %s424 = scalar_lea.vmem [#allocation5], %s423
        // Predicated region
        $region41: #{tpu_custom_call.1} parent=35 // pred_check
          %p425 = pneg %p149
        $region42: #{tpu_custom_call.1} parent=35 // pred_check_branch
          %427 = sbr.rel (%p425) target = $region44
        $region43: #{tpu_custom_call.1} parent=35 // pred_region
          %s428 = smul.u32 2, %s26
          %s430 = ssub.s32 1024, 1024
          %431 = vsyncadd %s421, %s430
          %s432 = smul.addr %s25, 8
          %s433 = sadd.s32 %s428, %s432
          %s434 = smul.addr %s433, 128
          %s435 = scalar_lea.hbm %s4, %s434
          %s436 = sshll.u32 %s424, 4
          %s437 = int_to_ptr.vmem [resolvable:$true] %s436
          %442 = dma.vmem_to_hbm [thread:$0]  %s437, 1024, %s435, %s421, 256, 256, 16
        $region44: #{tpu_custom_call.1} parent=35 // pred_fallthru
          _
      $region36: #{tpu_custom_call.1} parent=5 // pred_fallthru
        _
      %p443 = scmp.le.s32.totalorder 2, %s16
      // Predicated region
      $region45: #{tpu_custom_call.1} parent=5 // pred_check
        %p444 = pneg %p443
      $region46: #{tpu_custom_call.1} parent=5 // pred_check_branch
        %446 = sbr.rel (%p444) target = $region48
      $region47: #{tpu_custom_call.1} parent=5 // pred_region
        %s447 = ssub.s32 %s16, 2
        // Predicated region
        $region49: #{tpu_custom_call.1} parent=47 // pred_check
          %p448 = pneg %p155
        $region50: #{tpu_custom_call.1} parent=47 // pred_check_branch
          %450 = sbr.rel (%p448) target = $region52
        $region51: #{tpu_custom_call.1} parent=47 // pred_region
          %s451 = sand.u32 %s140, 1
          %s452 = scalar_lea.sflag [#allocation4], %s451
          %s453 = sand.u32 %s140, 1
          %s454 = smul.addr %s453, 64
          %s455 = scalar_lea.vmem [#allocation5], %s454
          %456 = dma.done %s452, 1024
        $region52: #{tpu_custom_call.1} parent=47 // pred_fallthru
          _
      $region48: #{tpu_custom_call.1} parent=5 // pred_fallthru
        _
    $region6: #{tpu_custom_call.1} parent=1 // loop_footer
      %s20 = sadd.s32 1, %s16
    $region7: #{tpu_custom_call.1} parent=1 // loop_footer_branch
      %15 = sbr.rel target = $region3
    $region8: #{tpu_custom_call.1} parent=1 // loop_exit
      _
    %457 = vsyncpa [#allocation3], 1
    %s458 = scalar_lea.sflag [#allocation3], 1
    %459 = vsyncpa %s458, 1
    %460 = vsyncpa [#allocation4], 1
    %s461 = scalar_lea.sflag [#allocation4], 1
    %462 = vsyncpa %s461, 1

</llo_original>
